<compile_context>
chip_gen: v5e
topology: v5e:2x2
jax: 0.10.0
libtpu: 0.0.40
codegen_flags: <defaults>
</compile_context>

<pallas_src>
import jax
import jax.numpy as jnp
from jax import lax
from jax.experimental import pallas as pl
from jax.experimental.pallas import tpu as pltpu

LANE = 128
SUBLANE = 8
TARGET_TILE_ROWS = 8192           # 8192 x 128 x 4B = 4 MiB per f32 input tile
_INV_LN2 = 1.4426950408889634
_MIB = 1024 * 1024


def _sublane_multiple(arrays):
    """Row granularity respecting packed (8,128)/(16,128)/(32,128) tiles."""
    m = SUBLANE
    for a in arrays:
        it = int(a.dtype.itemsize)
        m = max(m, SUBLANE * max(1, 4 // it))   # f32 -> 8, bf16 -> 16, int8 -> 32
    return m


def _streamed_mean(arrays, tile_fn, tail_fn):
    """mean(elementwise_fn(*arrays)) with the 128-lane-aligned bulk streamed
    through a Pallas row-tiled reduction kernel (native dtype in, f32 out).

    `arrays` all have the same element count.  Returns an f32 scalar."""
    n = int(arrays[0].size)
    flats = [a.reshape(-1) for a in arrays]
    mult = _sublane_multiple(arrays)
    rows = n // LANE
    rows_k = rows if rows >= mult else 0      # rows handled by the kernel
    bulk = rows_k * LANE

    total = jnp.zeros((), jnp.float32)

    if rows_k:
        # Tile is a multiple of the packed sublane granularity and never
        # larger than the array; a non-divisible row count is absorbed by
        # masking the last (padded) block in-kernel.
        tile_rows = min(TARGET_TILE_ROWS, (rows_k // mult) * mult)
        n_tiles = -(-rows_k // tile_rows)
        masked = (rows_k % tile_rows) != 0    # static

        if bulk == n:
            slabs = [f.reshape(rows_k, LANE) for f in flats]        # zero-copy
        else:
            # size % 128 != 0: one bulk slice copy (only in the unaligned case)
            slabs = [f[:bulk].reshape(rows_k, LANE) for f in flats]

        def kernel(*refs):
            in_refs, out_ref = refs[:-1], refs[-1]
            i = pl.program_id(0)

            @pl.when(i == 0)
            def _():
                out_ref[...] = jnp.zeros_like(out_ref)

            vals = tile_fn(*[r[...].astype(jnp.float32) for r in in_refs])
            if masked:
                valid = jnp.where(i == pl.num_programs(0) - 1,
                                  rows_k - i * tile_rows, tile_rows)
                rid = lax.broadcasted_iota(jnp.int32, vals.shape, 0)
                vals = jnp.where(rid < valid, vals, 0.0)
            # (tile_rows, 128) -> (tile_rows//8, 8, 128); sum over the leading
            # vreg axis is pure VPU adds (no per-tile cross-lane XLU work).
            out_ref[...] += jnp.sum(vals.reshape(-1, SUBLANE, LANE), axis=0)

        tile_bytes = sum(tile_rows * LANE * int(a.dtype.itemsize)
                         for a in arrays)
        # Double-buffered input tiles + slack; >= v5e's 16 MiB scoped default,
        # <= 48 MiB so it always fits v7x's 64 MiB physical VMEM.
        vmem_bytes = int(min(48 * _MIB, max(16 * _MIB, 2 * tile_bytes + 4 * _MIB)))

        lanes = pl.pallas_call(
            kernel,
            out_shape=jax.ShapeDtypeStruct((SUBLANE, LANE), jnp.float32),
            grid=(n_tiles,),
            in_specs=[pl.BlockSpec((tile_rows, LANE), lambda i: (i, 0))
                      for _ in slabs],
            out_specs=pl.BlockSpec((SUBLANE, LANE), lambda i: (0, 0)),
            compiler_params=pltpu.CompilerParams(
                dimension_semantics=("arbitrary",),
                vmem_limit_bytes=vmem_bytes),
        )(*slabs)
        total = total + jnp.sum(lanes)

    if bulk < n:
        # <128-element tail (plus a <mult*128-element remainder for tiny
        # inputs): negligible jnp reduction outside the kernel.
        tails = [f[bulk:].astype(jnp.float32) for f in flats]
        total = total + jnp.sum(tail_fn(*tails))

    return total / jnp.float32(n)


def _sq_err(x, x_r):
    d = x_r - x
    return d * d


def _neg_log2(p):
    # -log2(p) = log(p) * (-1/ln2): log on the EUP, constant multiply on VPU.
    return jnp.log(p) * jnp.float32(-_INV_LN2)


def rate_distorsion(x, x_r, p_y, distorsion_lambda=0.01):
    """JAX/Pallas equivalent of RateDistorsion.forward. Returns (loss, None)."""
    dist = _streamed_mean([x, x_r], _sq_err, _sq_err)
    rate = _streamed_mean([p_y], _neg_log2, _neg_log2)
    loss = jnp.float32(distorsion_lambda) * dist + rate
    return loss, None


def _reference(x, x_r, p_y, lam=0.01):
    dist = jnp.mean((x_r.astype(jnp.float32) - x.astype(jnp.float32)) ** 2)
    rate = jnp.mean(-jnp.log2(p_y.astype(jnp.float32)))
    return lam * dist + rate


if __name__ == "__main__":
    key = jax.random.PRNGKey(0)
    k1, k2, k3, k4, k5, k6 = jax.random.split(key, 6)

    # Case 1: small NCHW shapes consistent with the module (128-aligned sizes).
    x = jax.random.normal(k1, (2, 4, 16, 16), dtype=jnp.float32)
    x_r = x + 0.05 * jax.random.normal(k2, (2, 4, 16, 16), dtype=jnp.float32)
    p_y = jax.random.uniform(k3, (2, 8, 8, 8), dtype=jnp.float32,
                             minval=1e-3, maxval=1.0)
    loss, aux = rate_distorsion(x, x_r, p_y, distorsion_lambda=0.01)
    loss = jax.block_until_ready(loss)
    ref = _reference(x, x_r, p_y, lam=0.01)
    assert aux is None
    assert jnp.allclose(loss, ref, rtol=1e-5, atol=1e-5), (loss, ref)

    # Case 2: unaligned sizes (exercise the masked last tile + jnp tail path).
    x2 = jax.random.normal(k4, (2, 5, 7, 19), dtype=jnp.float32)     # 1330 elems
    x2_r = x2 + 0.05 * jax.random.normal(k5, (2, 5, 7, 19), dtype=jnp.float32)
    p2 = jax.random.uniform(k6, (3, 5, 7, 11), dtype=jnp.float32,    # 1155 elems
                            minval=1e-3, maxval=1.0)
    loss2, aux2 = rate_distorsion(x2, x2_r, p2, distorsion_lambda=0.01)
    loss2 = jax.block_until_ready(loss2)
    ref2 = _reference(x2, x2_r, p2, lam=0.01)
    assert aux2 is None
    assert jnp.allclose(loss2, ref2, rtol=1e-5, atol=1e-5), (loss2, ref2)

    print("KERNEL_OK")
</pallas_src>

<mosaic_0001>
module attributes {stable_mosaic.version = 11 : i64} {
  func.func @kernel(%arg0: i32, %arg1: memref<16x128xf32, #tpu.memory_space<vmem>>, %arg2: memref<16x128xf32, #tpu.memory_space<vmem>>, %arg3: memref<8x128xf32, #tpu.memory_space<vmem>>) attributes {dimension_semantics = [#tpu.dimension_semantics<arbitrary>], iteration_bounds = array<i64: 1>, scalar_prefetch = 0 : i64, scratch_operands = 0 : i64, tpu.core_type = #tpu.core_type<tc>, window_params = [{transform_indices = @transform_0, window_bounds = array<i64: 16, 128>}, {transform_indices = @transform_1, window_bounds = array<i64: 16, 128>}, {pipeline_mode = #tpu.pipeline_mode<synchronous>, transform_indices = @transform_2, window_bounds = array<i64: 8, 128>}]} {
    %c0_i32 = arith.constant 0 : i32
    %0 = arith.cmpi eq, %arg0, %c0_i32 : i32
    %1 = arith.extui %0 : i1 to i32
    %c0_i32_0 = arith.constant 0 : i32
    %2 = arith.cmpi ne, %1, %c0_i32_0 : i32
    scf.if %2 {
      %cst_8 = arith.constant 0.000000e+00 : f32
      %12 = vector.broadcast %cst_8 : f32 to vector<8x128xf32>
      %c0_9 = arith.constant 0 : index
      %c0_10 = arith.constant 0 : index
      %13 = vector.load %arg3[%c0_9, %c0_10] : memref<8x128xf32, #tpu.memory_space<vmem>>, vector<8x128xf32>
      tpu.vector_store %arg3[%c0_9, %c0_10], %12 {strides = array<i32>} : memref<8x128xf32, #tpu.memory_space<vmem>>, vector<8x128xf32>,
    } else {
    }
    %c0 = arith.constant 0 : index
    %c0_1 = arith.constant 0 : index
    %3 = vector.load %arg1[%c0, %c0_1] : memref<16x128xf32, #tpu.memory_space<vmem>>, vector<16x128xf32>
    %c0_2 = arith.constant 0 : index
    %c0_3 = arith.constant 0 : index
    %4 = vector.load %arg2[%c0_2, %c0_3] : memref<16x128xf32, #tpu.memory_space<vmem>>, vector<16x128xf32>
    %5 = arith.subf %4, %3 : vector<16x128xf32>
    %6 = arith.mulf %5, %5 : vector<16x128xf32>
    %c0_4 = arith.constant 0 : index
    %c0_5 = arith.constant 0 : index
    %7 = vector.load %arg3[%c0_4, %c0_5] : memref<8x128xf32, #tpu.memory_space<vmem>>, vector<8x128xf32>
    %8 = vector.shape_cast %6 : vector<16x128xf32> to vector<2x8x128xf32>
    %cst = arith.constant dense<0.000000e+00> : vector<8x128xf32>
    %9 = vector.multi_reduction <add>, %8, %cst [0] : vector<2x8x128xf32> to vector<8x128xf32>
    %10 = arith.addf %7, %9 : vector<8x128xf32>
    %c0_6 = arith.constant 0 : index
    %c0_7 = arith.constant 0 : index
    %11 = vector.load %arg3[%c0_6, %c0_7] : memref<8x128xf32, #tpu.memory_space<vmem>>, vector<8x128xf32>
    tpu.vector_store %arg3[%c0_6, %c0_7], %10 {strides = array<i32>} : memref<8x128xf32, #tpu.memory_space<vmem>>, vector<8x128xf32>,
    return
  }
  func.func @transform_0(%arg0: i32) -> (i32, i32) {
    %c0_i32 = arith.constant 0 : i32
    %c0_i32_0 = arith.constant 0 : i32
    return %arg0, %c0_i32 : i32, i32
  }
  func.func @transform_1(%arg0: i32) -> (i32, i32) {
    %c0_i32 = arith.constant 0 : i32
    %c0_i32_0 = arith.constant 0 : i32
    return %arg0, %c0_i32 : i32, i32
  }
  func.func @transform_2(%arg0: i32) -> (i32, i32) {
    %c0_i32 = arith.constant 0 : i32
    %c0_i32_0 = arith.constant 0 : i32
    %c0_i32_1 = arith.constant 0 : i32
    return %c0_i32, %c0_i32_0 : i32, i32
  }
}

</mosaic_0001>

<llo_original>
// kernel: tpu_custom_call.1
$region0: #{tpu_custom_call.1}
  #allocation0 [shape = 'u32[]', space=smem, size = 0x4, offset = 0x4, fixed_abs, tag = 'smem constant byte address 0x4 - core index']
  #allocation1 [shape = 'u32[72,128]{1,0:T(1,128)}', space=vmem, size = 0x9000, scoped, tag = 'internal scratch']
  %s0 = inlined_call_operand.hbm [shape: f32[16,128], index: 0, kind: input, shape index: {}]
  %s1 = inlined_call_operand.hbm [shape: f32[16,128], index: 1, kind: input, shape index: {}]
  %s2 = inlined_call_operand.hbm [shape: f32[8,128], index: 2, kind: output, shape index: {}]
  %s3 = sld [smem:[#allocation0]]
  $region30: #{tpu_custom_call.1} parent=0
    _
  %s5 = ssub.s32 1, %s3
  %s6 = scalar_select 0, %s5, %s3
  $region1: #{tpu_custom_call.1} parent=0
    #allocation2 [shape = 'u8[8192]{0}', space=vmem, size = 0x2000, scoped, tag = 'input window, operand 0, single buffered']
    #allocation3 [shape = 's32[1]{0}', space=sflag, size = 0x4, scoped, tag = 'scoped memory for tpu_custom_call.1']
    #allocation4 [shape = 's32[1]{0}', space=sflag, size = 0x4, scoped, tag = 'scoped memory for tpu_custom_call.1']
    #allocation5 [shape = 'u8[8192]{0}', space=vmem, size = 0x2000, scoped, tag = 'input window, operand 1, single buffered']
    #allocation6 [shape = 's32[1]{0}', space=sflag, size = 0x4, scoped, tag = 'scoped memory for tpu_custom_call.1']
    #allocation7 [shape = 'u8[4096]{0}', space=vmem, size = 0x1000, scoped, tag = 'output window, operand 0, single buffered']
    %7 = vsyncpa [#allocation3], 0
    %8 = vsyncpa [#allocation6], 0
    %9 = vsyncpa [#allocation4], 0
    // Predicated region
    $region2: #{tpu_custom_call.1} parent=1 // pred_check
      _
    $region3: #{tpu_custom_call.1} parent=1 // pred_check_branch
      %11 = sbr.rel (0) target = $region5
    $region4: #{tpu_custom_call.1} parent=1 // pred_region
      %13 = vsyncadd [#allocation3], 0
      %s14 = sshll.u32 %s0, 4
      %s15 = int_to_ptr.hbm [resolvable:$true] %s14
      %s16 = sshll.u32 [#allocation2], 4
      %s17 = int_to_ptr.vmem [resolvable:$true] %s16
      %22 = dma.hbm_to_vmem [thread:$0]  %s15, 256, %s17, [#allocation3], 128, 128, 8
    $region5: #{tpu_custom_call.1} parent=1 // pred_fallthru
      _
    // Predicated region
    $region6: #{tpu_custom_call.1} parent=1 // pred_check
      _
    $region7: #{tpu_custom_call.1} parent=1 // pred_check_branch
      %24 = sbr.rel (0) target = $region9
    $region8: #{tpu_custom_call.1} parent=1 // pred_region
      %26 = vsyncadd [#allocation6], 0
      %s27 = sshll.u32 %s1, 4
      %s28 = int_to_ptr.hbm [resolvable:$true] %s27
      %s29 = sshll.u32 [#allocation5], 4
      %s30 = int_to_ptr.vmem [resolvable:$true] %s29
      %35 = dma.hbm_to_vmem [thread:$0]  %s28, 256, %s30, [#allocation6], 128, 128, 8
    $region9: #{tpu_custom_call.1} parent=1 // pred_fallthru
      _
    // Predicated region
    $region10: #{tpu_custom_call.1} parent=1 // pred_check
      _
    $region11: #{tpu_custom_call.1} parent=1 // pred_check_branch
      %37 = sbr.rel (0) target = $region13
    $region12: #{tpu_custom_call.1} parent=1 // pred_region
      %39 = dma.done [#allocation3], 256
    $region13: #{tpu_custom_call.1} parent=1 // pred_fallthru
      _
    // Predicated region
    $region14: #{tpu_custom_call.1} parent=1 // pred_check
      _
    $region15: #{tpu_custom_call.1} parent=1 // pred_check_branch
      %41 = sbr.rel (0) target = $region17
    $region16: #{tpu_custom_call.1} parent=1 // pred_region
      %43 = dma.done [#allocation6], 256
    $region17: #{tpu_custom_call.1} parent=1 // pred_fallthru
      _
    %p44 = scmp.eq.s32.totalorder 0, 0
    // Predicated region
    $region18: #{tpu_custom_call.1} parent=1 // pred_check
      %p45 = pneg %p44
    $region19: #{tpu_custom_call.1} parent=1 // pred_check_branch
      %47 = sbr.rel (%p45) target = $region21
    $region20: #{tpu_custom_call.1} parent=1 // pred_region
      %48 = vst [vmem:[#allocation7] sm:$0xff] 0.0
    $region21: #{tpu_custom_call.1} parent=1 // pred_fallthru
      _
    %v49 = vld [vmem:[#allocation2] sm:$0xff]
    %v50 = vld [vmem:[#allocation2 + $0x8] sm:$0xff]
    %v51 = vld [vmem:[#allocation5] sm:$0xff]
    %v52 = vld [vmem:[#allocation5 + $0x8] sm:$0xff]
    %v53 = vsub.f32 %v51, %v49
    %v54 = vsub.f32 %v52, %v50
    %v55 = vmul.f32 %v53, %v53
    %v56 = vmul.f32 %v54, %v54
    %v57 = vld [vmem:[#allocation7] sm:$0xff]
    %v58 = vadd.f32 %v55, %v56
    %v59 = vadd.f32 %v57, %v58
    %60 = vst [vmem:[#allocation7] sm:$0xff] %v59
    // Predicated region
    $region22: #{tpu_custom_call.1} parent=1 // pred_check
      _
    $region23: #{tpu_custom_call.1} parent=1 // pred_check_branch
      %62 = sbr.rel (0) target = $region25
    $region24: #{tpu_custom_call.1} parent=1 // pred_region
      %64 = vsyncadd [#allocation4], 0
      %s66 = sshll.u32 [#allocation7], 4
      %s67 = int_to_ptr.vmem [resolvable:$true] %s66
      %s68 = sshll.u32 %s2, 4
      %s69 = int_to_ptr.hbm [resolvable:$true] %s68
      %71 = dma.vmem_to_hbm [thread:$0]  %s67, 128, %s69, [#allocation4]
    $region25: #{tpu_custom_call.1} parent=1 // pred_fallthru
      _
    // Predicated region
    $region26: #{tpu_custom_call.1} parent=1 // pred_check
      _
    $region27: #{tpu_custom_call.1} parent=1 // pred_check_branch
      %73 = sbr.rel (0) target = $region29
    $region28: #{tpu_custom_call.1} parent=1 // pred_region
      %75 = dma.done [#allocation4], 128
    $region29: #{tpu_custom_call.1} parent=1 // pred_fallthru
      _
    %76 = vsyncpa [#allocation3], 1
    %77 = vsyncpa [#allocation6], 1
    %78 = vsyncpa [#allocation4], 1

</llo_original>
